<compile_context>
chip_gen: v5e
topology: v5e:2x2
jax: 0.10.0
libtpu: 0.0.40
codegen_flags: <defaults>
</compile_context>

<pallas_src>
import math

import jax
import jax.numpy as jnp
from jax.experimental import pallas as pl
from jax.experimental.pallas import tpu as pltpu

_LANE = 128                         # lane-dense last dim (full vreg lane width)
_TARGET_BLOCK_BYTES = 2 * 1024 * 1024   # ~2 MiB per block (HBM-roofline plateau)
_MIN_GRID = 4                       # keep >=4 grid steps on large inputs (v7x 2 TCs)
_VMEM_LIMIT = 32 * 1024 * 1024      # scoped VMEM limit; valid on v5e/v6e/v7x


# ---------------------------------------------------------------------------
# Kernels
# ---------------------------------------------------------------------------
def _scalar_mul_kernel(x_ref, w_ref, o_ref):
    # x_ref: (block_rows, 128) VMEM tile; w_ref: (1,) scalar in SMEM.
    o_ref[...] = (x_ref[...] * w_ref[0]).astype(o_ref.dtype)


def _rowvec_mul_kernel(x_ref, w_ref, o_ref):
    # x_ref: (block_rows, C) VMEM tile; w_ref: (1, C) resident VMEM weight.
    o_ref[...] = (x_ref[...] * w_ref[...]).astype(o_ref.dtype)


def _tensor_mul_kernel(x_ref, w_ref, o_ref):
    # Both operands streamed with identical lane-dense tiling.
    o_ref[...] = (x_ref[...] * w_ref[...]).astype(o_ref.dtype)


# ---------------------------------------------------------------------------
# Tiling helpers
# ---------------------------------------------------------------------------
def _round_up(a, b):
    return ((a + b - 1) // b) * b


def _sublane_multiple(min_itemsize):
    # f32 -> 8, bf16 -> 16, int8/fp8 -> 32
    return max(8, 32 // max(int(min_itemsize), 1))


def _pick_block_rows(n_rows, row_bytes, min_itemsize):
    """Pick a row block: ~2 MiB, dtype-aligned, and >= _MIN_GRID steps when big."""
    sub = _sublane_multiple(min_itemsize)
    target = max(_TARGET_BLOCK_BYTES // max(row_bytes, 1), 1)
    target = max((target // sub) * sub, sub)
    cap = _round_up(pl.cdiv(n_rows, _MIN_GRID), sub)
    return max(min(target, cap), sub)


def _smem_dtype(dt):
    dt = jnp.dtype(dt)
    if jnp.issubdtype(dt, jnp.floating):
        return jnp.float32
    if jnp.issubdtype(dt, jnp.signedinteger):
        return jnp.int32
    if jnp.issubdtype(dt, jnp.unsignedinteger):
        return jnp.uint32
    return dt


def _compiler_params():
    return pltpu.CompilerParams(
        dimension_semantics=("parallel",),
        vmem_limit_bytes=_VMEM_LIMIT,
    )


def _is_lastdim_weight(wshape, xshape):
    """weight broadcasts against x purely along x's last axis."""
    if len(xshape) < 1 or len(wshape) < 1 or len(wshape) > len(xshape):
        return False
    if wshape[-1] != xshape[-1] or xshape[-1] <= 1:
        return False
    return all(d == 1 for d in wshape[:-1])


# ---------------------------------------------------------------------------
# Paths
# ---------------------------------------------------------------------------
def _mul_scalar(x, weight, out_dtype, orig_shape, total, donate_x):
    n_rows = pl.cdiv(total, _LANE)
    pad = n_rows * _LANE - total

    xf = jnp.ravel(x)
    if pad:  # rare slow path: total % 128 != 0
        xf = jnp.pad(xf, (0, pad))
    x2 = xf.reshape(n_rows, _LANE)

    itemsizes = (x2.dtype.itemsize, jnp.dtype(out_dtype).itemsize)
    block_rows = _pick_block_rows(n_rows, _LANE * max(itemsizes), min(itemsizes))
    grid = (pl.cdiv(n_rows, block_rows),)
    tile = pl.BlockSpec((block_rows, _LANE), lambda i: (i, 0))

    w = weight.reshape(1).astype(_smem_dtype(out_dtype))
    aliases = {0: 0} if (donate_x and x2.dtype == jnp.dtype(out_dtype)) else {}

    out2 = pl.pallas_call(
        _scalar_mul_kernel,
        out_shape=jax.ShapeDtypeStruct((n_rows, _LANE), out_dtype),
        grid_spec=pltpu.PrefetchScalarGridSpec(
            num_scalar_prefetch=0,
            grid=grid,
            in_specs=[tile, pl.BlockSpec(memory_space=pltpu.MemorySpace.SMEM)],
            out_specs=tile,
        ),
        compiler_params=_compiler_params(),
        input_output_aliases=aliases,
    )(x2, w)

    out = out2.reshape(-1)
    if pad:
        out = out[:total]
    return out.reshape(orig_shape)


def _mul_lastdim(x, weight, out_dtype, orig_shape, donate_x):
    # Per-last-dim weight: keep it resident in VMEM (constant index_map),
    # broadcast inside the kernel.  No broadcast materialization in HBM.
    C = orig_shape[-1]
    R = math.prod(orig_shape[:-1]) if len(orig_shape) > 1 else 1
    x2 = x.reshape(R, C)
    w2 = weight.reshape(1, C)

    itemsizes = (x2.dtype.itemsize, jnp.dtype(out_dtype).itemsize)
    block_rows = _pick_block_rows(R, C * max(itemsizes), min(itemsizes))
    grid = (pl.cdiv(R, block_rows),)
    x_tile = pl.BlockSpec((block_rows, C), lambda i: (i, 0))
    w_tile = pl.BlockSpec((1, C), lambda i: (0, 0))  # same block every step

    aliases = {0: 0} if (donate_x and x2.dtype == jnp.dtype(out_dtype)) else {}

    out2 = pl.pallas_call(
        _rowvec_mul_kernel,
        out_shape=jax.ShapeDtypeStruct((R, C), out_dtype),
        grid_spec=pltpu.PrefetchScalarGridSpec(
            num_scalar_prefetch=0,
            grid=grid,
            in_specs=[x_tile, w_tile],
            out_specs=x_tile,
        ),
        compiler_params=_compiler_params(),
        input_output_aliases=aliases,
    )(x2, w2)
    return out2.reshape(orig_shape)


def _mul_streamed(x, weight, out_dtype, orig_shape, total, donate_x):
    # Genuine fallback: weight does not reduce to scalar / last-dim vector.
    wb = jnp.broadcast_to(weight, orig_shape)
    n_rows = pl.cdiv(total, _LANE)
    pad = n_rows * _LANE - total

    def prep(a):
        af = jnp.ravel(a)
        if pad:
            af = jnp.pad(af, (0, pad))
        return af.reshape(n_rows, _LANE)

    x2, w2 = prep(x), prep(wb)

    itemsizes = (x2.dtype.itemsize, w2.dtype.itemsize, jnp.dtype(out_dtype).itemsize)
    block_rows = _pick_block_rows(n_rows, _LANE * max(itemsizes), min(itemsizes))
    grid = (pl.cdiv(n_rows, block_rows),)
    tile = pl.BlockSpec((block_rows, _LANE), lambda i: (i, 0))

    aliases = {0: 0} if (donate_x and x2.dtype == jnp.dtype(out_dtype)) else {}

    out2 = pl.pallas_call(
        _tensor_mul_kernel,
        out_shape=jax.ShapeDtypeStruct((n_rows, _LANE), out_dtype),
        grid_spec=pltpu.PrefetchScalarGridSpec(
            num_scalar_prefetch=0,
            grid=grid,
            in_specs=[tile, tile],
            out_specs=tile,
        ),
        compiler_params=_compiler_params(),
        input_output_aliases=aliases,
    )(x2, w2)

    out = out2.reshape(-1)
    if pad:
        out = out[:total]
    return out.reshape(orig_shape)


# ---------------------------------------------------------------------------
# Public entry point: Mul.forward(x) = x * weight
# ---------------------------------------------------------------------------
def mul(x, weight, *, donate_x=False):
    orig_shape = x.shape
    out_dtype = jnp.result_type(x, weight)   # before asarray: keeps weak typing
    weight = jnp.asarray(weight)
    total = math.prod(orig_shape) if orig_shape else 1

    if total == 0:
        return jnp.zeros(orig_shape, out_dtype)

    if weight.size == 1:
        return _mul_scalar(x, weight, out_dtype, orig_shape, total, donate_x)
    if _is_lastdim_weight(weight.shape, orig_shape):
        return _mul_lastdim(x, weight, out_dtype, orig_shape, donate_x)
    return _mul_streamed(x, weight, out_dtype, orig_shape, total, donate_x)


if __name__ == "__main__":
    key = jax.random.PRNGKey(0)
    kx, kw, kc = jax.random.split(key, 3)

    # Primary case: scalar weight, as in Mul(w).
    x = jax.random.normal(kx, (2, 4, 16, 16), dtype=jnp.float32)
    weight = jax.random.normal(kw, (), dtype=jnp.float32)
    out = mul(x, weight)
    jax.block_until_ready(out)
    assert out.shape == x.shape
    assert jnp.allclose(out, x * weight, atol=1e-6, rtol=1e-6), "scalar-weight mismatch"

    # Ragged case: total not a multiple of 128 (pad/slice slow path).
    xr = jax.random.normal(kx, (3, 5, 7), dtype=jnp.float32)
    out_r = mul(xr, weight)
    jax.block_until_ready(out_r)
    assert jnp.allclose(out_r, xr * weight, atol=1e-6, rtol=1e-6), "ragged mismatch"

    # Broadcastable (per-last-dim) weight: resident-VMEM path.
    wc = jax.random.normal(kc, (16,), dtype=jnp.float32)
    out_c = mul(x, wc)
    jax.block_until_ready(out_c)
    assert jnp.allclose(out_c, x * wc, atol=1e-6, rtol=1e-6), "per-channel mismatch"

    print("KERNEL_OK")
</pallas_src>

<mosaic_0001>
module attributes {stable_mosaic.version = 11 : i64} {
  func.func @_scalar_mul_kernel(%arg0: i32, %arg1: memref<8x128xf32, #tpu.memory_space<vmem>>, %arg2: memref<1xf32, #tpu.memory_space<smem>>, %arg3: memref<8x128xf32, #tpu.memory_space<vmem>>) attributes {dimension_semantics = [#tpu.dimension_semantics<parallel>], iteration_bounds = array<i64: 2>, scalar_prefetch = 0 : i64, scratch_operands = 0 : i64, tpu.core_type = #tpu.core_type<tc>, window_params = [{transform_indices = @transform_0, window_bounds = array<i64: 8, 128>}, {transform_indices = @transform_1, window_bounds = array<i64: 1>}, {transform_indices = @transform_2, window_bounds = array<i64: 8, 128>}]} {
    %c0 = arith.constant 0 : index
    %c0_0 = arith.constant 0 : index
    %0 = vector.load %arg1[%c0, %c0_0] : memref<8x128xf32, #tpu.memory_space<vmem>>, vector<8x128xf32>
    %c0_1 = arith.constant 0 : index
    %1 = memref.load %arg2[%c0_1] : memref<1xf32, #tpu.memory_space<smem>>
    %2 = vector.broadcast %1 : f32 to vector<8x128xf32>
    %3 = arith.mulf %0, %2 : vector<8x128xf32>
    %c0_2 = arith.constant 0 : index
    %c0_3 = arith.constant 0 : index
    %4 = vector.load %arg3[%c0_2, %c0_3] : memref<8x128xf32, #tpu.memory_space<vmem>>, vector<8x128xf32>
    tpu.vector_store %arg3[%c0_2, %c0_3], %3 {strides = array<i32>} : memref<8x128xf32, #tpu.memory_space<vmem>>, vector<8x128xf32>,
    return
  }
  func.func @transform_0(%arg0: i32) -> (i32, i32) {
    %c0_i32 = arith.constant 0 : i32
    %c0_i32_0 = arith.constant 0 : i32
    return %arg0, %c0_i32 : i32, i32
  }
  func.func @transform_1(%arg0: i32) -> i32 {
    %c0_i32 = arith.constant 0 : i32
    %c0_i32_0 = arith.constant 0 : i32
    return %c0_i32 : i32
  }
  func.func @transform_2(%arg0: i32) -> (i32, i32) {
    %c0_i32 = arith.constant 0 : i32
    %c0_i32_0 = arith.constant 0 : i32
    return %arg0, %c0_i32 : i32, i32
  }
}

</mosaic_0001>

<llo_original>
// kernel: tpu_custom_call.1
$region0: #{tpu_custom_call.1}
  #allocation0 [shape = 'u32[]', space=smem, size = 0x4, offset = 0x4, fixed_abs, tag = 'smem constant byte address 0x4 - core index']
  #allocation1 [shape = 'u32[72,128]{1,0:T(1,128)}', space=vmem, size = 0x9000, scoped, tag = 'internal scratch']
  #allocation2 [shape = 'f32[1]{0:T(128)S(6)}', space=smem, size = 0x200, scoped, tag = 'scoped memory for tpu_custom_call.1']
  %s0 = inlined_call_operand.hbm [shape: f32[16,128], index: 0, kind: input, shape index: {}]
  %s1 = inlined_call_operand.<no memory space> [shape: f32[1], index: 1, kind: input, shape index: {}]
  %s2 = inlined_call_operand.hbm [shape: f32[16,128], index: 2, kind: output, shape index: {}]
  %s3 = sld [smem:[#allocation0]]
  $region45: #{tpu_custom_call.1} parent=0
    _
  %s5 = ssub.s32 1, %s3
  %s6 = scalar_select 0, %s5, %s3
  %7 = sst [smem:[#allocation2]] %s1
  $region1: #{tpu_custom_call.1} parent=0
    #allocation3 [shape = 'u8[8192]{0}', space=vmem, size = 0x2000, scoped, tag = 'input window, operand 0']
    #allocation4 [shape = 's32[2]{0}', space=sflag, size = 0x8, scoped, tag = 'scoped memory for tpu_custom_call.1']
    #allocation5 [shape = 's32[2]{0}', space=sflag, size = 0x8, scoped, tag = 'scoped memory for tpu_custom_call.1']
    #allocation6 [shape = 'u8[8192]{0}', space=vmem, size = 0x2000, scoped, tag = 'output window, operand 0']
    %8 = vsyncpa [#allocation4], 0
    %s9 = scalar_lea.sflag [#allocation4], 1
    %10 = vsyncpa %s9, 0
    %11 = vsyncpa [#allocation5], 0
    %s12 = scalar_lea.sflag [#allocation5], 1
    %13 = vsyncpa %s12, 0
    loop: start=0, step=1, limit=4
    $region2: #{tpu_custom_call.1} parent=1 // loop_pre_header
      _
    $region3: #{tpu_custom_call.1} parent=1 // loop_header
      %s15 = sphi 0, %s19
      %p16 = scmp.ge.s32.totalorder %s15, 4
      %s25 = sphi 0, %s27
      %s28 = sphi 0, %s25
      %s29 = sphi 0, %s28
      %s45 = sphi 0, %s29
      %s49 = sphi 0, %s49
      %s51 = sphi 0, %s49
      %s52 = sphi 0, %s51
      %s66 = sphi 0, %s52
      %s72 = sphi 0, %s74
      %s75 = sphi 0, %s72
      %s76 = sphi 0, %s75
      %s92 = sphi 0, %s76
    $region4: #{tpu_custom_call.1} parent=1 // loop_header_branch
      %18 = sbr.rel (%p16) target = $region8
    $region5: #{tpu_custom_call.1} parent=1 // loop_body
      %s20 = ssub.s32 %s15, 1
      %s21 = ssub.s32 %s15, 2
      %s22 = sadd.s32 %s15, 1
      %s23 = ssub.s32 %s15, %s22
      %p24 = scmp.eq.s32.totalorder %s23, 0
      %s26 = sadd.s32 %s25, 1
      %s27 = scalar_select %p24, %s25, %s26
      %p30 = pneg %p24
      %p31 = scmp.eq.s32.totalorder %s15, 1
      %p32 = por %p30, %p31
      %p33 = scmp.ne.s32.totalorder %s25, %s28
      %p34 = scmp.eq.s32.totalorder %s15, 0
      %p35 = por %p33, %p34
      %p36 = scmp.ne.s32.totalorder %s25, %s28
      %p37 = scmp.eq.s32.totalorder %s20, 1
      %p38 = por %p36, %p37
      %p39 = scmp.ne.s32.totalorder %s28, %s29
      %p40 = scmp.eq.s32.totalorder %s20, 0
      %p41 = por %p39, %p40
      %p42 = scmp.ne.s32.totalorder %s28, %s29
      %p43 = scmp.eq.s32.totalorder %s21, 1
      %p44 = por %p42, %p43
      %p46 = scmp.ne.s32.totalorder %s29, %s45
      %p47 = scmp.eq.s32.totalorder %s21, 0
      %p48 = por %p46, %p47
      %s50 = sadd.s32 %s49, 1
      %p53 = scmp.eq.s32.totalorder %s15, 1
      %p54 = scmp.ne.s32.totalorder %s49, %s51
      %p55 = scmp.eq.s32.totalorder %s15, 0
      %p56 = por %p54, %p55
      %p57 = scmp.ne.s32.totalorder %s49, %s51
      %p58 = scmp.eq.s32.totalorder %s20, 1
      %p59 = por %p57, %p58
      %p60 = scmp.ne.s32.totalorder %s51, %s52
      %p61 = scmp.eq.s32.totalorder %s20, 0
      %p62 = por %p60, %p61
      %p63 = scmp.ne.s32.totalorder %s51, %s52
      %p64 = scmp.eq.s32.totalorder %s21, 1
      %p65 = por %p63, %p64
      %p67 = scmp.ne.s32.totalorder %s52, %s66
      %p68 = scmp.eq.s32.totalorder %s21, 0
      %p69 = por %p67, %p68
      %s70 = ssub.s32 %s15, %s22
      %p71 = scmp.eq.s32.totalorder %s70, 0
      %s73 = sadd.s32 %s72, 1
      %s74 = scalar_select %p71, %s72, %s73
      %p77 = pneg %p71
      %p78 = scmp.eq.s32.totalorder %s15, 1
      %p79 = por %p77, %p78
      %p80 = scmp.ne.s32.totalorder %s72, %s75
      %p81 = scmp.eq.s32.totalorder %s15, 0
      %p82 = por %p80, %p81
      %p83 = scmp.ne.s32.totalorder %s72, %s75
      %p84 = scmp.eq.s32.totalorder %s20, 1
      %p85 = por %p83, %p84
      %p86 = scmp.ne.s32.totalorder %s75, %s76
      %p87 = scmp.eq.s32.totalorder %s20, 0
      %p88 = por %p86, %p87
      %p89 = scmp.ne.s32.totalorder %s75, %s76
      %p90 = scmp.eq.s32.totalorder %s21, 1
      %p91 = por %p89, %p90
      %p93 = scmp.ne.s32.totalorder %s76, %s92
      %p94 = scmp.eq.s32.totalorder %s21, 0
      %p95 = por %p93, %p94
      %p96 = scmp.le.s32.totalorder 1, %s15
      %p97 = scmp.lt.s32.totalorder %s15, 3
      %p98 = pnand %p96, %p97
      %p99 = pneg %p98
      // Predicated region
      $region9: #{tpu_custom_call.1} parent=5 // pred_check
        _
      $region10: #{tpu_custom_call.1} parent=5 // pred_check_branch
        %101 = sbr.rel (%p98) target = $region12
      $region11: #{tpu_custom_call.1} parent=5 // pred_region
        %s102 = ssub.s32 %s15, 1
        // Predicated region
        $region13: #{tpu_custom_call.1} parent=11 // pred_check
          %p103 = pneg %p62
        $region14: #{tpu_custom_call.1} parent=11 // pred_check_branch
          %105 = sbr.rel (%p103) target = $region16
        $region15: #{tpu_custom_call.1} parent=11 // pred_region
          _
        $region16: #{tpu_custom_call.1} parent=11 // pred_fallthru
          _
      $region12: #{tpu_custom_call.1} parent=5 // pred_fallthru
        _
      %p106 = scmp.lt.s32.totalorder %s15, 2
      // Predicated region
      $region17: #{tpu_custom_call.1} parent=5 // pred_check
        %p107 = pneg %p106
      $region18: #{tpu_custom_call.1} parent=5 // pred_check_branch
        %109 = sbr.rel (%p107) target = $region20
      $region19: #{tpu_custom_call.1} parent=5 // pred_region
        // Predicated region
        $region21: #{tpu_custom_call.1} parent=19 // pred_check
          %p110 = pneg %p35
        $region22: #{tpu_custom_call.1} parent=19 // pred_check_branch
          %112 = sbr.rel (%p110) target = $region24
        $region23: #{tpu_custom_call.1} parent=19 // pred_region
          %s113 = sand.u32 %s25, 1
          %s114 = scalar_lea.sflag [#allocation4], %s113
          %s115 = sand.u32 %s25, 1
          %s116 = smul.addr %s115, 8
          %s117 = scalar_lea.vmem [#allocation3], %s116
          %119 = vsyncadd %s114, 0
          %s120 = smul.addr %s15, 8
          %s121 = scalar_lea.hbm %s0, %s120
          %s123 = sshll.u32 %s121, 4
          %s124 = int_to_ptr.hbm [resolvable:$true] %s123
          %s125 = sshll.u32 %s117, 4
          %s126 = int_to_ptr.vmem [resolvable:$true] %s125
          %128 = dma.hbm_to_vmem [thread:$0]  %s124, 128, %s126, %s114
        $region24: #{tpu_custom_call.1} parent=19 // pred_fallthru
          _
      $region20: #{tpu_custom_call.1} parent=5 // pred_fallthru
        _
      %p129 = scmp.le.s32.totalorder 1, %s15
      %p130 = scmp.lt.s32.totalorder %s15, 3
      %p131 = pnand %p129, %p130
      %p132 = pneg %p131
      // Predicated region
      $region25: #{tpu_custom_call.1} parent=5 // pred_check
        _
      $region26: #{tpu_custom_call.1} parent=5 // pred_check_branch
        %134 = sbr.rel (%p131) target = $region28
      $region27: #{tpu_custom_call.1} parent=5 // pred_region
        %s135 = ssub.s32 %s15, 1
        %s136 = sand.u32 %s28, 1
        %s137 = scalar_lea.sflag [#allocation4], %s136
        %s138 = sand.u32 %s28, 1
        %s139 = smul.addr %s138, 8
        %s140 = scalar_lea.vmem [#allocation3], %s139
        // Predicated region
        $region29: #{tpu_custom_call.1} parent=27 // pred_check
          %p141 = pneg %p41
        $region30: #{tpu_custom_call.1} parent=27 // pred_check_branch
          %143 = sbr.rel (%p141) target = $region32
        $region31: #{tpu_custom_call.1} parent=27 // pred_region
          %145 = dma.done %s137, 128
        $region32: #{tpu_custom_call.1} parent=27 // pred_fallthru
          _
        %s146 = sand.u32 %s28, 1
        %s147 = scalar_lea.sflag [#allocation4], %s146
        %s148 = sand.u32 %s28, 1
        %s149 = smul.addr %s148, 8
        %s150 = scalar_lea.vmem [#allocation3], %s149
        %p151 = pneg %p41
        %p152 = pneg %p38
        %p153 = pneg %p62
        %p154 = pneg %p59
        %p155 = pneg %p88
        %p156 = pneg %p85
        %s157 = sand.u32 %s75, 1
        %s158 = scalar_lea.sflag [#allocation5], %s157
        %s159 = sand.u32 %s75, 1
        %s160 = smul.addr %s159, 8
        %s161 = scalar_lea.vmem [#allocation6], %s160
        %v162 = vld [vmem:[%s140] sm:$0xff]
        %s163 = sld [smem:[#allocation2]]
        %v164 = vstv %s163
        %v165 = vmul.f32 %v162, %v164
        %166 = vst [vmem:[%s161] sm:$0xff] %v165
        %s167 = sand.u32 %s75, 1
        %s168 = scalar_lea.sflag [#allocation5], %s167
        %s169 = sand.u32 %s75, 1
        %s170 = smul.addr %s169, 8
        %s171 = scalar_lea.vmem [#allocation6], %s170
        // Predicated region
        $region33: #{tpu_custom_call.1} parent=27 // pred_check
          %p172 = pneg %p85
        $region34: #{tpu_custom_call.1} parent=27 // pred_check_branch
          %174 = sbr.rel (%p172) target = $region36
        $region35: #{tpu_custom_call.1} parent=27 // pred_region
          %176 = vsyncadd %s168, 0
          %s177 = smul.addr %s20, 8
          %s178 = scalar_lea.hbm %s2, %s177
          %s180 = sshll.u32 %s171, 4
          %s181 = int_to_ptr.vmem [resolvable:$true] %s180
          %s182 = sshll.u32 %s178, 4
          %s183 = int_to_ptr.hbm [resolvable:$true] %s182
          %185 = dma.vmem_to_hbm [thread:$0]  %s181, 128, %s183, %s168
        $region36: #{tpu_custom_call.1} parent=27 // pred_fallthru
          _
      $region28: #{tpu_custom_call.1} parent=5 // pred_fallthru
        _
      %p186 = scmp.le.s32.totalorder 2, %s15
      // Predicated region
      $region37: #{tpu_custom_call.1} parent=5 // pred_check
        %p187 = pneg %p186
      $region38: #{tpu_custom_call.1} parent=5 // pred_check_branch
        %189 = sbr.rel (%p187) target = $region40
      $region39: #{tpu_custom_call.1} parent=5 // pred_region
        %s190 = ssub.s32 %s15, 2
        // Predicated region
        $region41: #{tpu_custom_call.1} parent=39 // pred_check
          %p191 = pneg %p91
        $region42: #{tpu_custom_call.1} parent=39 // pred_check_branch
          %193 = sbr.rel (%p191) target = $region44
        $region43: #{tpu_custom_call.1} parent=39 // pred_region
          %s194 = sand.u32 %s76, 1
          %s195 = scalar_lea.sflag [#allocation5], %s194
          %s196 = sand.u32 %s76, 1
          %s197 = smul.addr %s196, 8
          %s198 = scalar_lea.vmem [#allocation6], %s197
          %200 = dma.done %s195, 128
        $region44: #{tpu_custom_call.1} parent=39 // pred_fallthru
          _
      $region40: #{tpu_custom_call.1} parent=5 // pred_fallthru
        _
    $region6: #{tpu_custom_call.1} parent=1 // loop_footer
      %s19 = sadd.s32 1, %s15
    $region7: #{tpu_custom_call.1} parent=1 // loop_footer_branch
      %14 = sbr.rel target = $region3
    $region8: #{tpu_custom_call.1} parent=1 // loop_exit
      _
    %201 = vsyncpa [#allocation4], 1
    %s202 = scalar_lea.sflag [#allocation4], 1
    %203 = vsyncpa %s202, 1
    %204 = vsyncpa [#allocation5], 1
    %s205 = scalar_lea.sflag [#allocation5], 1
    %206 = vsyncpa %s205, 1

</llo_original>
